<compile_context>
chip_gen: v7x
topology: tpu7x:2x2x1
jax: 0.10.0
libtpu: 0.0.40
codegen_flags: <defaults>
</compile_context>

<pallas_src>
import jax
import jax.numpy as jnp
from jax.experimental import pallas as pl
from jax.experimental.pallas import tpu as pltpu

_LANES = 128


def _modified_silu_kernel(x_ref, o_ref):
    xf = x_ref[...].astype(jnp.float32)          # f32 math: required on v5e (no bf16 VPU/EUP)
    sig = 0.5 * jnp.tanh(0.5 * xf) + 0.5         # sigmoid via one EUP transcendental
    out = xf * sig + jnp.exp(xf * xf * -0.25)    # second EUP transcendental
    o_ref[...] = out.astype(o_ref.dtype)


def _device_kind() -> str:
    try:
        return jax.devices()[0].device_kind.lower()
    except Exception:
        return ""


def _gen_params(kind: str):
    """(f32-equivalent target block bytes, vmem_limit_bytes, dimension_semantics)."""
    if "v7" in kind or "7x" in kind:
        # 64 MiB physical VMEM per TC: ~6 MiB blocks, leave headroom for temps.
        return 6 << 20, 56 << 20, (pltpu.CORE_PARALLEL,)
    if "v6" in kind:
        return 8 << 20, 96 << 20, ("parallel",)
    if "v5p" in kind:
        return 8 << 20, 96 << 20, ("parallel",)
    # v5e / v4 / unknown: conservative (v5e default scoped limit is small).
    return 4 << 20, 64 << 20, ("parallel",)


def _sublane(itemsize: int) -> int:
    # Native sublane packing: f32 -> 8, bf16/f16 -> 16, int8/fp8 -> 32.
    return {4: 8, 2: 16, 1: 32}.get(itemsize, 8)


def modified_silu(x: jax.Array) -> jax.Array:
    orig_shape = x.shape
    orig_dtype = x.dtype

    flat = x.reshape(-1)
    n = flat.shape[0]
    if n == 0:
        return x

    itemsize = jnp.dtype(orig_dtype).itemsize
    sub = _sublane(itemsize)

    # Fast path (common case): element count already a multiple of 128 lanes.
    padded = (n % _LANES) != 0
    if padded:
        # TODO(synk): handle the <128-element ragged tail with an in-kernel
        # masked store instead of whole-array pad + slice (extra HBM passes).
        n_pad = pl.cdiv(n, _LANES) * _LANES
        flat = jnp.pad(flat, (0, n_pad - n))
    else:
        n_pad = n

    rows = n_pad // _LANES
    x2d = flat.reshape(rows, _LANES)

    kind = _device_kind()
    target_bytes, vmem_limit, dim_sem = _gen_params(kind)

    # Size the block by element count (f32-equivalent bytes) so the in-kernel
    # f32 upcast / elementwise temps don't blow VMEM for narrow dtypes.
    elem_bytes = max(itemsize, 4)
    tr_target = max(sub, ((target_bytes // elem_bytes) // _LANES) // sub * sub)

    # VMEM-budget guard: 2x-buffered native in+out (~4*itemsize/elem) plus
    # ~3 live f32 block temps (~12 B/elem) must fit the scoped limit.
    per_row_bytes = _LANES * (4 * itemsize + 3 * 4)
    tr_cap = max(sub, ((vmem_limit - (2 << 20)) // per_row_bytes) // sub * sub)
    tr_target = min(tr_target, tr_cap)

    tr = rows if rows <= tr_target else tr_target   # full array or big aligned tile
    grid = (pl.cdiv(rows, tr),)

    cost = pl.CostEstimate(
        flops=8 * n,
        transcendentals=2 * n,                      # tanh + exp per element
        bytes_accessed=2 * n * itemsize,
    )

    out2d = pl.pallas_call(
        _modified_silu_kernel,
        out_shape=jax.ShapeDtypeStruct((rows, _LANES), orig_dtype),
        grid_spec=pltpu.PrefetchScalarGridSpec(
            num_scalar_prefetch=0,
            grid=grid,
            in_specs=[pl.BlockSpec((tr, _LANES), lambda i: (i, 0))],
            out_specs=pl.BlockSpec((tr, _LANES), lambda i: (i, 0)),
        ),
        compiler_params=pltpu.CompilerParams(
            dimension_semantics=dim_sem,
            vmem_limit_bytes=int(vmem_limit),
        ),
        cost_estimate=cost,
    )(x2d)

    out_flat = out2d.reshape(-1)
    if padded:
        out_flat = out_flat[:n]
    return out_flat.reshape(orig_shape)


def _reference(x):
    xf = x.astype(jnp.float32)
    return (xf * jax.nn.sigmoid(xf) + jnp.exp(-(xf ** 2) / 4.0)).astype(x.dtype)


if __name__ == "__main__":
    key = jax.random.PRNGKey(0)
    x = jax.random.normal(key, (2, 4, 16, 16), dtype=jnp.float32)  # NCHW-style input

    out = modified_silu(x)
    out = jax.block_until_ready(out)

    ref = _reference(x)
    assert out.shape == x.shape and out.dtype == x.dtype
    assert jnp.allclose(out, ref, atol=1e-5, rtol=1e-5), "mismatch vs reference"

    # Ragged-size check (exercises the pad/cdiv fallback path).
    x2 = jax.random.normal(jax.random.PRNGKey(1), (3, 7, 5), dtype=jnp.float32)
    out2 = jax.block_until_ready(modified_silu(x2))
    assert jnp.allclose(out2, _reference(x2), atol=1e-5, rtol=1e-5), "ragged mismatch"

    # bf16 check (exercises dtype-aware sublane/element sizing + f32 upcast).
    x3 = jax.random.normal(jax.random.PRNGKey(2), (4, 8, 32), dtype=jnp.bfloat16)
    out3 = jax.block_until_ready(modified_silu(x3))
    assert jnp.allclose(out3.astype(jnp.float32), _reference(x3).astype(jnp.float32),
                        atol=2e-2, rtol=2e-2), "bf16 mismatch"

    print("KERNEL_OK")
</pallas_src>

<mosaic_0001>
module attributes {stable_mosaic.version = 11 : i64} {
  func.func @_modified_silu_kernel(%arg0: i32, %arg1: memref<16x128xf32, #tpu.memory_space<vmem>>, %arg2: memref<16x128xf32, #tpu.memory_space<vmem>>) attributes {dimension_semantics = [#tpu.dimension_semantics<parallel>], iteration_bounds = array<i64: 1>, scalar_prefetch = 0 : i64, scratch_operands = 0 : i64, tpu.core_type = #tpu.core_type<tc>, window_params = [{transform_indices = @transform_0, window_bounds = array<i64: 16, 128>}, {transform_indices = @transform_1, window_bounds = array<i64: 16, 128>}]} {
    %c0 = arith.constant 0 : index
    %c0_0 = arith.constant 0 : index
    %0 = vector.load %arg1[%c0, %c0_0] : memref<16x128xf32, #tpu.memory_space<vmem>>, vector<16x128xf32>
    %cst = arith.constant 5.000000e-01 : f32
    %1 = vector.broadcast %cst : f32 to vector<16x128xf32>
    %2 = arith.mulf %1, %0 : vector<16x128xf32>
    %3 = math.tanh %2 : vector<16x128xf32>
    %cst_1 = arith.constant 5.000000e-01 : f32
    %4 = vector.broadcast %cst_1 : f32 to vector<16x128xf32>
    %5 = arith.mulf %4, %3 : vector<16x128xf32>
    %cst_2 = arith.constant 5.000000e-01 : f32
    %6 = vector.broadcast %cst_2 : f32 to vector<16x128xf32>
    %7 = arith.addf %5, %6 : vector<16x128xf32>
    %8 = arith.mulf %0, %7 : vector<16x128xf32>
    %9 = arith.mulf %0, %0 : vector<16x128xf32>
    %cst_3 = arith.constant -2.500000e-01 : f32
    %10 = vector.broadcast %cst_3 : f32 to vector<16x128xf32>
    %11 = arith.mulf %9, %10 : vector<16x128xf32>
    %12 = math.exp %11 : vector<16x128xf32>
    %13 = arith.addf %8, %12 : vector<16x128xf32>
    %c0_4 = arith.constant 0 : index
    %c0_5 = arith.constant 0 : index
    %14 = vector.load %arg2[%c0_4, %c0_5] : memref<16x128xf32, #tpu.memory_space<vmem>>, vector<16x128xf32>
    tpu.vector_store %arg2[%c0_4, %c0_5], %13 {strides = array<i32>} : memref<16x128xf32, #tpu.memory_space<vmem>>, vector<16x128xf32>,
    return
  }
  func.func @transform_0(%arg0: i32) -> (i32, i32) {
    %c0_i32 = arith.constant 0 : i32
    %c0_i32_0 = arith.constant 0 : i32
    return %arg0, %c0_i32 : i32, i32
  }
  func.func @transform_1(%arg0: i32) -> (i32, i32) {
    %c0_i32 = arith.constant 0 : i32
    %c0_i32_0 = arith.constant 0 : i32
    return %arg0, %c0_i32 : i32, i32
  }
}

</mosaic_0001>

<llo_original>
// kernel: tpu_custom_call.1
$region0: #{tpu_custom_call.1}
  #allocation0 [shape = 'u32[]', space=smem, size = 0x4, offset = 0x4, fixed_abs, tag = 'smem constant byte address 0x4 - core index']
  #allocation1 [shape = 'u32[144,128]{1,0:T(1,128)}', space=vmem, size = 0x12000, scoped, tag = 'internal scratch']
  %s0 = inlined_call_operand.hbm [shape: f32[16,128], index: 0, kind: input, shape index: {}]
  %s1 = inlined_call_operand.hbm [shape: f32[16,128], index: 1, kind: output, shape index: {}]
  %s2 = sld [smem:[#allocation0]]
  $region18: #{tpu_custom_call.1} parent=0
    _
  %s4 = ssub.s32 1, %s2
  %s5 = scalar_select 0, %s4, %s2
  $region1: #{tpu_custom_call.1} parent=0
    #allocation2 [shape = 'u8[8192]{0}', space=vmem, size = 0x2000, scoped, tag = 'input window, operand 0, single buffered']
    #allocation3 [shape = 's32[1]{0}', space=sflag, size = 0x4, scoped, tag = 'scoped memory for tpu_custom_call.1']
    #allocation4 [shape = 's32[1]{0}', space=sflag, size = 0x4, scoped, tag = 'scoped memory for tpu_custom_call.1']
    #allocation5 [shape = 'u8[8192]{0}', space=vmem, size = 0x2000, scoped, tag = 'output window, operand 0, single buffered']
    %6 = vsyncpa [#allocation3], 0
    %7 = vsyncpa [#allocation4], 0
    // Predicated region
    $region2: #{tpu_custom_call.1} parent=1 // pred_check
      _
    $region3: #{tpu_custom_call.1} parent=1 // pred_check_branch
      %9 = sbr.rel (0) target = $region5
    $region4: #{tpu_custom_call.1} parent=1 // pred_region
      %s11 = ssub.s32 256, 256
      %12 = vsyncadd [#allocation3], %s11
      %s13 = sshll.u32 [#allocation2], 4
      %s14 = int_to_ptr.vmem [resolvable:$true] %s13
      %19 = dma.hbm_to_vmem [thread:$0]  %s0, 256, %s14, [#allocation3], 128, 128, 8
    $region5: #{tpu_custom_call.1} parent=1 // pred_fallthru
      _
    // Predicated region
    $region6: #{tpu_custom_call.1} parent=1 // pred_check
      _
    $region7: #{tpu_custom_call.1} parent=1 // pred_check_branch
      %21 = sbr.rel (0) target = $region9
    $region8: #{tpu_custom_call.1} parent=1 // pred_region
      %22 = dma.done [#allocation3], 256
    $region9: #{tpu_custom_call.1} parent=1 // pred_fallthru
      _
    %v23 = vld [vmem:[#allocation2] sm:$0xff]
    %v24 = vld [vmem:[#allocation2 + $0x8] sm:$0xff]
    %v25 = vmul.f32 %v23, 0.5
    %v26 = vmul.f32 %v24, 0.5
    %v27 = vtanh.pop %v25
    %v28 = vtanh.pop %v26
    %v29 = vmul.f32 %v27, 0.5
    %v30 = vmul.f32 %v28, 0.5
    %v31 = vadd.f32 %v29, 0.5
    %v32 = vadd.f32 %v30, 0.5
    %v33 = vmul.f32 %v23, %v31
    %v34 = vmul.f32 %v24, %v32
    %v35 = vmul.f32 %v23, %v23
    %v36 = vmul.f32 %v24, %v24
    %v37 = vmul.f32 %v35, -0.25
    %v38 = vmul.f32 %v36, -0.25
    %v39 = vmul.f32 %v37, 1.442695
    %v40 = vpow.pop %v39
    %v41 = vmul.f32 %v38, 1.442695
    %v42 = vpow.pop %v41
    %v43 = vadd.f32 %v33, %v40
    %v44 = vadd.f32 %v34, %v42
    %45 = vst [vmem:[#allocation5] sm:$0xff] %v43
    %46 = vst [vmem:[#allocation5 + $0x8] sm:$0xff] %v44
    // Predicated region
    $region10: #{tpu_custom_call.1} parent=1 // pred_check
      _
    $region11: #{tpu_custom_call.1} parent=1 // pred_check_branch
      %48 = sbr.rel (0) target = $region13
    $region12: #{tpu_custom_call.1} parent=1 // pred_region
      %s50 = ssub.s32 256, 256
      %51 = vsyncadd [#allocation4], %s50
      %s52 = sshll.u32 [#allocation5], 4
      %s53 = int_to_ptr.vmem [resolvable:$true] %s52
      %58 = dma.vmem_to_hbm [thread:$0]  %s53, 256, %s1, [#allocation4], 128, 128, 8
    $region13: #{tpu_custom_call.1} parent=1 // pred_fallthru
      _
    // Predicated region
    $region14: #{tpu_custom_call.1} parent=1 // pred_check
      _
    $region15: #{tpu_custom_call.1} parent=1 // pred_check_branch
      %60 = sbr.rel (0) target = $region17
    $region16: #{tpu_custom_call.1} parent=1 // pred_region
      %61 = dma.done [#allocation4], 256
    $region17: #{tpu_custom_call.1} parent=1 // pred_fallthru
      _
    %62 = vsyncpa [#allocation3], 1
    %63 = vsyncpa [#allocation4], 1

</llo_original>
